<compile_context>
chip_gen: v7x
topology: tpu7x:2x2x1
jax: 0.10.0
libtpu: 0.0.40
codegen_flags: <defaults>
</compile_context>

<pallas_src>
import jax
import jax.numpy as jnp
from jax import lax
from jax.experimental import pallas as pl
from jax.experimental.pallas import tpu as pltpu


def _round_up(x, m):
    return ((x + m - 1) // m) * m


def _physical_vmem_bytes():
    """Physical VMEM per TensorCore; conservative (v7x, 64 MiB) fallback."""
    try:
        return int(pltpu.get_tpu_info().vmem_capacity_bytes)
    except Exception:
        return 64 * 1024 * 1024


def _step_vmem_bytes(tn, m_pad, d, feat_bytes, out_bytes):
    """Rough per-grid-step VMEM footprint of the finalize pass (the larger one)."""
    ref_t = 2 * tn * d * feat_bytes            # double-buffered LHS tile
    src_t = 2 * m_pad * d * feat_bytes         # resident RHS (still double-buffered)
    out_t = 2 * tn * m_pad * out_bytes         # double-buffered output tile
    tmp = 2 * tn * m_pad * 4                   # f32 gram / exp temporaries
    small = 8 * (tn + m_pad) * 4               # masks, row/col sums, slack
    return ref_t + src_t + out_t + tmp + small


def _exp_scores(ref_ref, src_ref, scale):
    """exp(scale * <ref, src> - scale) for one (TN, D) x (M, D) tile.

    scale=2 -> exp(-(2 - 2<r,s>)) (the raw matching score);
    scale=4 -> its square (used by the dual-normalized finalize pass).
    The scale is folded into the small (TN, D) tile and is a power of two, so
    bf16 inputs stay exact and feed the MXU at native rate.
    """
    ref_s = ref_ref[...] * scale
    gram = lax.dot_general(
        ref_s, src_ref[...],
        dimension_numbers=(((1,), (1,)), ((), ())),   # contract D; no transpose
        preferred_element_type=jnp.float32)           # (TN, M) f32
    return jnp.exp(gram - scale)


def _sums_kernel(ref_ref, src_ref, rmask_ref, cmask_ref,
                 row_sum_ref, col_partial_ref):
    """Pass 1: masked row sums + per-row-tile PARTIAL column sums (megacore-friendly)."""
    scores = _exp_scores(ref_ref, src_ref, 2.0)              # (TN, M)
    masked = (scores * rmask_ref[...]) * cmask_ref[...]      # broadcast multiplies only
    row_sum_ref[...] = jnp.sum(masked, axis=1, keepdims=True)
    col_partial_ref[...] = jnp.sum(masked, axis=0, keepdims=True).reshape(1, 1, -1)


def _finalize_dual_kernel(ref_ref, src_ref, rmask_ref, cmask_ref,
                          row_sum_ref, col_sum_ref, out_ref):
    """Pass 2: scores^2 * inv_row_sum * inv_col_sum, -1 at masked/padded slots."""
    # exp(4<r,s> - 4) == scores**2: avoids one full (TN, M) VPU multiply.
    sq = _exp_scores(ref_ref, src_ref, 4.0)
    inv_r = pl.reciprocal(
        jnp.where(row_sum_ref[...] > 0.0, row_sum_ref[...], 1.0), approx=True)
    inv_c = pl.reciprocal(
        jnp.where(col_sum_ref[...] > 0.0, col_sum_ref[...], 1.0), approx=True)
    normalized = (sq * inv_r) * inv_c
    valid = (rmask_ref[...] > 0.0) & (cmask_ref[...] > 0.0)
    out_ref[...] = jnp.where(valid, normalized, -1.0).astype(out_ref.dtype)


def _finalize_plain_kernel(ref_ref, src_ref, rmask_ref, cmask_ref, out_ref):
    scores = _exp_scores(ref_ref, src_ref, 2.0)
    valid = (rmask_ref[...] > 0.0) & (cmask_ref[...] > 0.0)
    out_ref[...] = jnp.where(valid, scores, -1.0).astype(out_ref.dtype)


def superpoint_matching(ref_feats, src_feats, ref_masks=None, src_masks=None,
                        num_correspondences=128, dual_normalization=True,
                        row_tile=512, feature_dtype=jnp.bfloat16,
                        scores_dtype=jnp.bfloat16):
    """JAX/Pallas equivalent of SuperPointMatching.forward.

    Args:
      ref_feats: (N, D) float array (f32 or bf16; cast to `feature_dtype`).
      src_feats: (M, D) float array.
      ref_masks: (N,) bool array or None.
      src_masks: (M,) bool array or None.

    Returns:
      ref_corr_indices (int32), src_corr_indices (int32), corr_scores (float32)
    """
    N, D = ref_feats.shape
    M, _ = src_feats.shape

    if ref_masks is None:
        ref_masks = jnp.ones((N,), dtype=jnp.bool_)
    if src_masks is None:
        src_masks = jnp.ones((M,), dtype=jnp.bool_)

    feat_bytes = jnp.dtype(feature_dtype).itemsize
    out_bytes = jnp.dtype(scores_dtype).itemsize
    sub = 16 if feat_bytes < 4 else 8            # sublane packing (bf16 packs 16 rows)

    # Row tile (sublane axis) and lane-dense M padding.
    TN = min(_round_up(row_tile, sub), _round_up(N, sub))
    M_pad = _round_up(M, 128)

    # Fit the per-step footprint inside a per-generation VMEM budget
    # (~40 MiB of v7x's 64 MiB physical, ~79 MiB of v5e/v6e's 128 MiB).
    phys_vmem = _physical_vmem_bytes()
    budget = int(phys_vmem * 0.62)
    while TN > 128 and _step_vmem_bytes(TN, M_pad, D, feat_bytes, out_bytes) > budget:
        TN = max(128, _round_up(TN // 2, sub))
    N_pad = _round_up(N, TN)
    n_row_blocks = N_pad // TN
    vmem_limit = min(
        max(budget, int(_step_vmem_bytes(TN, M_pad, D, feat_bytes, out_bytes) * 1.2)),
        int(phys_vmem * 0.92))

    # bf16 features: half the DMA bytes + half the resident src VMEM, MXU-native.
    ref_p = jnp.pad(ref_feats.astype(feature_dtype), ((0, N_pad - N), (0, 0)))
    src_p = jnp.pad(src_feats.astype(feature_dtype), ((0, M_pad - M), (0, 0)))
    rmask = jnp.pad(ref_masks.astype(jnp.float32), (0, N_pad - N)).reshape(N_pad, 1)
    cmask = jnp.pad(src_masks.astype(jnp.float32), (0, M_pad - M)).reshape(1, M_pad)

    ref_spec = pl.BlockSpec((TN, D), lambda i: (i, 0))
    # Constant block index -> src/cmask stay resident across row tiles (no re-DMA).
    # TODO(synk): these constant-index blocks are still double-buffered; switch to
    # pipeline_mode=pl.Buffered(1) to reclaim that VMEM once validated on this build.
    src_spec = pl.BlockSpec((M_pad, D), lambda i: (0, 0))
    rmask_spec = pl.BlockSpec((TN, 1), lambda i: (i, 0))
    cmask_spec = pl.BlockSpec((1, M_pad), lambda i: (0, 0))
    out_spec = pl.BlockSpec((TN, M_pad), lambda i: (i, 0))

    flops_mm = 2 * N_pad * M_pad * D
    feat_read = (N_pad * D + n_row_blocks * M_pad * D) * feat_bytes
    mask_read = (N_pad + n_row_blocks * M_pad) * 4

    if dual_normalization:
        cost1 = pl.CostEstimate(
            flops=flops_mm + 4 * N_pad * M_pad,
            transcendentals=N_pad * M_pad,
            bytes_accessed=feat_read + mask_read + (N_pad + n_row_blocks * M_pad) * 4)
        # Pass 1: independent row tiles ("parallel" => megacore split on v7x);
        # column sums are emitted as per-tile partials and reduced in XLA below.
        row_sum, col_partial = pl.pallas_call(
            _sums_kernel,
            out_shape=(jax.ShapeDtypeStruct((N_pad, 1), jnp.float32),
                       jax.ShapeDtypeStruct((n_row_blocks, 1, M_pad), jnp.float32)),
            grid=(n_row_blocks,),
            in_specs=[ref_spec, src_spec, rmask_spec, cmask_spec],
            out_specs=(pl.BlockSpec((TN, 1), lambda i: (i, 0)),
                       pl.BlockSpec((1, 1, M_pad), lambda i: (i, 0, 0))),
            compiler_params=pltpu.CompilerParams(
                dimension_semantics=("parallel",),
                vmem_limit_bytes=vmem_limit),
            cost_estimate=cost1,
        )(ref_p, src_p, rmask, cmask)
        col_sum = jnp.sum(col_partial, axis=0)              # (1, M_pad), tiny XLA reduce

        cost2 = pl.CostEstimate(
            flops=flops_mm + 6 * N_pad * M_pad,
            transcendentals=N_pad * M_pad,
            bytes_accessed=feat_read + mask_read
            + N_pad * M_pad * out_bytes + (N_pad + n_row_blocks * M_pad) * 4)
        matching_scores = pl.pallas_call(
            _finalize_dual_kernel,
            out_shape=jax.ShapeDtypeStruct((N_pad, M_pad), scores_dtype),
            grid=(n_row_blocks,),
            in_specs=[ref_spec, src_spec, rmask_spec, cmask_spec,
                      pl.BlockSpec((TN, 1), lambda i: (i, 0)),
                      pl.BlockSpec((1, M_pad), lambda i: (0, 0))],
            out_specs=out_spec,
            compiler_params=pltpu.CompilerParams(
                dimension_semantics=("parallel",),
                vmem_limit_bytes=vmem_limit),
            cost_estimate=cost2,
        )(ref_p, src_p, rmask, cmask, row_sum, col_sum)
    else:
        cost2 = pl.CostEstimate(
            flops=flops_mm + 3 * N_pad * M_pad,
            transcendentals=N_pad * M_pad,
            bytes_accessed=feat_read + mask_read + N_pad * M_pad * out_bytes)
        matching_scores = pl.pallas_call(
            _finalize_plain_kernel,
            out_shape=jax.ShapeDtypeStruct((N_pad, M_pad), scores_dtype),
            grid=(n_row_blocks,),
            in_specs=[ref_spec, src_spec, rmask_spec, cmask_spec],
            out_specs=out_spec,
            compiler_params=pltpu.CompilerParams(
                dimension_semantics=("parallel",),
                vmem_limit_bytes=vmem_limit),
            cost_estimate=cost2,
        )(ref_p, src_p, rmask, cmask)

    # Two-stage top-k: per-row top-k candidates (bf16 scores -> half the HBM
    # round trip), then a small global top-k over N_pad * min(k, M) candidates.
    # Exact whenever there are at least `k` valid pairs, since each row
    # contributes at most min(k, M) entries to the global top-k.
    k = min(num_correspondences, N * M)
    k_row = min(k, M)
    cand_vals, cand_cols = lax.top_k(matching_scores, k_row)     # (N_pad, k_row)
    flat_vals = cand_vals.reshape(-1)
    flat_cols = cand_cols.reshape(-1)
    corr_scores, pos = lax.top_k(flat_vals, k)
    ref_corr_indices = (pos // k_row).astype(jnp.int32)
    src_corr_indices = jnp.take(flat_cols, pos).astype(jnp.int32)
    # TODO(synk): if fewer than `k` pairs are unmasked, -1/padded entries can be
    # selected; PyTorch's gather-then-topk differs in that degenerate regime.
    return ref_corr_indices, src_corr_indices, corr_scores.astype(jnp.float32)


if __name__ == "__main__":
    key = jax.random.PRNGKey(0)
    k1, k2 = jax.random.split(key)

    N, M, D = 32, 48, 32
    # SuperPoint features are typically L2-normalized; normalize for realism.
    ref_feats = jax.random.normal(k1, (N, D), dtype=jnp.float32)
    src_feats = jax.random.normal(k2, (M, D), dtype=jnp.float32)
    ref_feats = ref_feats / jnp.linalg.norm(ref_feats, axis=-1, keepdims=True)
    src_feats = src_feats / jnp.linalg.norm(src_feats, axis=-1, keepdims=True)

    ref_idx, src_idx, scores = superpoint_matching(
        ref_feats, src_feats,
        num_correspondences=128, dual_normalization=True)
    jax.block_until_ready((ref_idx, src_idx, scores))

    # Basic invariants: indices in range, selected scores positive & finite.
    assert ref_idx.shape == (128,) and src_idx.shape == (128,)
    assert bool(jnp.all((ref_idx >= 0) & (ref_idx < N)))
    assert bool(jnp.all((src_idx >= 0) & (src_idx < M)))
    assert bool(jnp.all(jnp.isfinite(scores))) and bool(jnp.all(scores > 0.0))

    print("KERNEL_OK")
</pallas_src>

<mosaic_0001>
module attributes {stable_mosaic.version = 11 : i64} {
  func.func @_sums_kernel(%arg0: i32, %arg1: memref<32x32xbf16, #tpu.memory_space<vmem>>, %arg2: memref<128x32xbf16, #tpu.memory_space<vmem>>, %arg3: memref<32x1xf32, #tpu.memory_space<vmem>>, %arg4: memref<1x128xf32, #tpu.memory_space<vmem>>, %arg5: memref<32x1xf32, #tpu.memory_space<vmem>>, %arg6: memref<1x1x128xf32, #tpu.memory_space<vmem>>) attributes {dimension_semantics = [#tpu.dimension_semantics<parallel>], iteration_bounds = array<i64: 1>, scalar_prefetch = 0 : i64, scratch_operands = 0 : i64, tpu.core_type = #tpu.core_type<tc>, window_params = [{transform_indices = @transform_0, window_bounds = array<i64: 32, 32>}, {pipeline_mode = #tpu.pipeline_mode<synchronous>, transform_indices = @transform_1, window_bounds = array<i64: 128, 32>}, {transform_indices = @transform_2, window_bounds = array<i64: 32, 1>}, {pipeline_mode = #tpu.pipeline_mode<synchronous>, transform_indices = @transform_3, window_bounds = array<i64: 1, 128>}, {transform_indices = @transform_4, window_bounds = array<i64: 32, 1>}, {transform_indices = @transform_5, window_bounds = array<i64: 1, 1, 128>}]} {
    %c0 = arith.constant 0 : index
    %c0_0 = arith.constant 0 : index
    %0 = vector.load %arg1[%c0, %c0_0] : memref<32x32xbf16, #tpu.memory_space<vmem>>, vector<32x32xbf16>
    %cst = arith.constant 2.000000e+00 : bf16
    %1 = vector.broadcast %cst : bf16 to vector<32x32xbf16>
    %2 = arith.mulf %0, %1 : vector<32x32xbf16>
    %c0_1 = arith.constant 0 : index
    %c0_2 = arith.constant 0 : index
    %3 = vector.load %arg2[%c0_1, %c0_2] : memref<128x32xbf16, #tpu.memory_space<vmem>>, vector<128x32xbf16>
    %cst_3 = arith.constant dense<0.000000e+00> : vector<32x128xf32>
    %4 = tpu.matmul %2, %3, %cst_3 {dimension_numbers = #tpu.dot_dimension_numbers<[1], [1], [0], [0], [0, 0, 1, 0], [], []>} : vector<32x32xbf16>, vector<128x32xbf16>, vector<32x128xf32> -> vector<32x128xf32>
    %cst_4 = arith.constant 2.000000e+00 : f32
    %5 = vector.broadcast %cst_4 : f32 to vector<32x128xf32>
    %6 = arith.subf %4, %5 : vector<32x128xf32>
    %7 = math.exp %6 : vector<32x128xf32>
    %c0_5 = arith.constant 0 : index
    %c0_6 = arith.constant 0 : index
    %8 = vector.load %arg3[%c0_5, %c0_6] : memref<32x1xf32, #tpu.memory_space<vmem>>, vector<32x1xf32>
    %9 = vector.broadcast %8 : vector<32x1xf32> to vector<32x128xf32>
    %10 = arith.mulf %7, %9 : vector<32x128xf32>
    %c0_7 = arith.constant 0 : index
    %c0_8 = arith.constant 0 : index
    %11 = vector.load %arg4[%c0_7, %c0_8] : memref<1x128xf32, #tpu.memory_space<vmem>>, vector<1x128xf32>
    %12 = vector.broadcast %11 : vector<1x128xf32> to vector<32x128xf32>
    %13 = arith.mulf %10, %12 : vector<32x128xf32>
    %cst_9 = arith.constant dense<0.000000e+00> : vector<32xf32>
    %14 = vector.multi_reduction <add>, %13, %cst_9 [1] : vector<32x128xf32> to vector<32xf32>
    %15 = vector.shape_cast %14 : vector<32xf32> to vector<32x1xf32>
    %c0_10 = arith.constant 0 : index
    %c0_11 = arith.constant 0 : index
    %16 = vector.load %arg5[%c0_10, %c0_11] : memref<32x1xf32, #tpu.memory_space<vmem>>, vector<32x1xf32>
    tpu.vector_store %arg5[%c0_10, %c0_11], %15 {strides = array<i32>} : memref<32x1xf32, #tpu.memory_space<vmem>>, vector<32x1xf32>,
    %cst_12 = arith.constant dense<0.000000e+00> : vector<128xf32>
    %17 = vector.multi_reduction <add>, %13, %cst_12 [0] : vector<32x128xf32> to vector<128xf32>
    %18 = vector.shape_cast %17 : vector<128xf32> to vector<1x128xf32>
    %19 = vector.shape_cast %18 : vector<1x128xf32> to vector<1x1x128xf32>
    %c0_13 = arith.constant 0 : index
    %c0_14 = arith.constant 0 : index
    %c0_15 = arith.constant 0 : index
    %20 = vector.load %arg6[%c0_13, %c0_14, %c0_15] : memref<1x1x128xf32, #tpu.memory_space<vmem>>, vector<1x1x128xf32>
    tpu.vector_store %arg6[%c0_13, %c0_14, %c0_15], %19 {strides = array<i32>} : memref<1x1x128xf32, #tpu.memory_space<vmem>>, vector<1x1x128xf32>,
    return
  }
  func.func @transform_0(%arg0: i32) -> (i32, i32) {
    %c0_i32 = arith.constant 0 : i32
    %c0_i32_0 = arith.constant 0 : i32
    return %arg0, %c0_i32 : i32, i32
  }
  func.func @transform_1(%arg0: i32) -> (i32, i32) {
    %c0_i32 = arith.constant 0 : i32
    %c0_i32_0 = arith.constant 0 : i32
    %c0_i32_1 = arith.constant 0 : i32
    return %c0_i32, %c0_i32_0 : i32, i32
  }
  func.func @transform_2(%arg0: i32) -> (i32, i32) {
    %c0_i32 = arith.constant 0 : i32
    %c0_i32_0 = arith.constant 0 : i32
    return %arg0, %c0_i32 : i32, i32
  }
  func.func @transform_3(%arg0: i32) -> (i32, i32) {
    %c0_i32 = arith.constant 0 : i32
    %c0_i32_0 = arith.constant 0 : i32
    %c0_i32_1 = arith.constant 0 : i32
    return %c0_i32, %c0_i32_0 : i32, i32
  }
  func.func @transform_4(%arg0: i32) -> (i32, i32) {
    %c0_i32 = arith.constant 0 : i32
    %c0_i32_0 = arith.constant 0 : i32
    return %arg0, %c0_i32 : i32, i32
  }
  func.func @transform_5(%arg0: i32) -> (i32, i32, i32) {
    %c0_i32 = arith.constant 0 : i32
    %c0_i32_0 = arith.constant 0 : i32
    %c0_i32_1 = arith.constant 0 : i32
    return %arg0, %c0_i32, %c0_i32_0 : i32, i32, i32
  }
}

</mosaic_0001>

<llo_original>
// kernel: tpu_custom_call.1
$region0: #{tpu_custom_call.1}
  #allocation0 [shape = 'u32[]', space=smem, size = 0x4, offset = 0x4, fixed_abs, tag = 'smem constant byte address 0x4 - core index']
  #allocation1 [shape = 'u32[144,128]{1,0:T(1,128)}', space=vmem, size = 0x12000, scoped, tag = 'internal scratch']
  %s0 = inlined_call_operand.vmem [shape: bf16[32,32], index: 0, kind: input, shape index: {}]
  %s1 = inlined_call_operand.vmem [shape: bf16[128,32], index: 1, kind: input, shape index: {}]
  %s2 = inlined_call_operand.vmem [shape: f32[32,1], index: 2, kind: input, shape index: {}]
  %s3 = inlined_call_operand.vmem [shape: f32[1,128], index: 3, kind: input, shape index: {}]
  %s4 = inlined_call_operand.vmem [shape: f32[32,1], index: 4, kind: output, shape index: {0}]
  %s5 = inlined_call_operand.hbm [shape: f32[1,1,128], index: 5, kind: output, shape index: {1}]
  %6 = xla_tuple %s4, %s5
  %s7 = sld [smem:[#allocation0]]
  $region34: #{tpu_custom_call.1} parent=0
    _
  %s9 = ssub.s32 1, %s7
  %s10 = scalar_select 0, %s9, %s7
  $region1: #{tpu_custom_call.1} parent=0
    #allocation2 [shape = 'u8[512]{0}', space=vmem, size = 0x400, scoped, tag = 'output window, operand 1, single buffered']
    #allocation3 [shape = 's32[1]{0}', space=sflag, size = 0x4, scoped, tag = 'scoped memory for tpu_custom_call.1']
    %11 = vsyncpa [#allocation3], 0
    // Predicated region
    $region2: #{tpu_custom_call.1} parent=1 // pred_check
      _
    $region3: #{tpu_custom_call.1} parent=1 // pred_check_branch
      %13 = sbr.rel (0) target = $region5
    $region4: #{tpu_custom_call.1} parent=1 // pred_region
      _
    $region5: #{tpu_custom_call.1} parent=1 // pred_fallthru
      _
    // Predicated region
    $region6: #{tpu_custom_call.1} parent=1 // pred_check
      _
    $region7: #{tpu_custom_call.1} parent=1 // pred_check_branch
      %15 = sbr.rel (0) target = $region9
    $region8: #{tpu_custom_call.1} parent=1 // pred_region
      _
    $region9: #{tpu_custom_call.1} parent=1 // pred_fallthru
      _
    // Predicated region
    $region10: #{tpu_custom_call.1} parent=1 // pred_check
      _
    $region11: #{tpu_custom_call.1} parent=1 // pred_check_branch
      %17 = sbr.rel (0) target = $region13
    $region12: #{tpu_custom_call.1} parent=1 // pred_region
      _
    $region13: #{tpu_custom_call.1} parent=1 // pred_fallthru
      _
    // Predicated region
    $region14: #{tpu_custom_call.1} parent=1 // pred_check
      _
    $region15: #{tpu_custom_call.1} parent=1 // pred_check_branch
      %19 = sbr.rel (0) target = $region17
    $region16: #{tpu_custom_call.1} parent=1 // pred_region
      _
    $region17: #{tpu_custom_call.1} parent=1 // pred_fallthru
      _
    %v22 = vld [vmem:[%s0] sm:$0xf]
    %v23 = vld [vmem:[%s0 + $0x4] sm:$0xf]
    %v24 = vld [vmem:[%s0 + $0x8] sm:$0xf]
    %v25 = vld [vmem:[%s0 + $0xc] sm:$0xf]
    %v26 = vmul.bf16 %v22, 1073758208
    %v27 = vmul.bf16 %v23, 1073758208
    %v28 = vmul.bf16 %v24, 1073758208
    %v29 = vmul.bf16 %v25, 1073758208
    %v30 = vld [vmem:[%s1] sm:$0xf]
    %v31 = vld [vmem:[%s1 + $0x4] sm:$0xf]
    %v32 = vld [vmem:[%s1 + $0x8] sm:$0xf]
    %v33 = vld [vmem:[%s1 + $0xc] sm:$0xf]
    %v34 = vld [vmem:[%s1 + $0x10] sm:$0xf]
    %v35 = vld [vmem:[%s1 + $0x14] sm:$0xf]
    %v36 = vld [vmem:[%s1 + $0x18] sm:$0xf]
    %v37 = vld [vmem:[%s1 + $0x1c] sm:$0xf]
    %v38 = vld [vmem:[%s1 + $0x20] sm:$0xf]
    %v39 = vld [vmem:[%s1 + $0x24] sm:$0xf]
    %v40 = vld [vmem:[%s1 + $0x28] sm:$0xf]
    %v41 = vld [vmem:[%s1 + $0x2c] sm:$0xf]
    %v42 = vld [vmem:[%s1 + $0x30] sm:$0xf]
    %v43 = vld [vmem:[%s1 + $0x34] sm:$0xf]
    %v44 = vld [vmem:[%s1 + $0x38] sm:$0xf]
    %v45 = vld [vmem:[%s1 + $0x3c] sm:$0xf]
    %v50 = vunpack.c.l.b16 %v26
    %v51 = vunpack.c.l.b16 %v27
    %v52 = vunpack.c.l.b16 %v28
    %v53 = vunpack.c.l.b16 %v29
    %v54 = vpack.c.b16 %v51, %v50
    %v55 = vpack.c.b16 %v53, %v52
    %v72 = vunpack.c.l.b16 %v30
    %v73 = vunpack.c.l.b16 %v31
    %v74 = vunpack.c.l.b16 %v32
    %v75 = vunpack.c.l.b16 %v33
    %v76 = vunpack.c.l.b16 %v34
    %v77 = vunpack.c.l.b16 %v35
    %v78 = vunpack.c.l.b16 %v36
    %v79 = vunpack.c.l.b16 %v37
    %v80 = vunpack.c.l.b16 %v38
    %v81 = vunpack.c.l.b16 %v39
    %v82 = vunpack.c.l.b16 %v40
    %v83 = vunpack.c.l.b16 %v41
    %v84 = vunpack.c.l.b16 %v42
    %v85 = vunpack.c.l.b16 %v43
    %v86 = vunpack.c.l.b16 %v44
    %v87 = vunpack.c.l.b16 %v45
    %v88 = vpack.c.b16 %v73, %v72
    %v89 = vpack.c.b16 %v75, %v74
    %v90 = vpack.c.b16 %v77, %v76
    %v91 = vpack.c.b16 %v79, %v78
    %v92 = vpack.c.b16 %v81, %v80
    %v93 = vpack.c.b16 %v83, %v82
    %v94 = vpack.c.b16 %v85, %v84
    %v95 = vpack.c.b16 %v87, %v86
    %vm96 = vcmask 261120
    %v98 = vsel %vm96, %v54, 0
    %v101 = vsel %vm96, %v55, 0
    %v104 = vsel %vm96, %v88, 0
    %v107 = vsel %vm96, %v89, 0
    %v110 = vsel %vm96, %v90, 0
    %v113 = vsel %vm96, %v91, 0
    %v116 = vsel %vm96, %v92, 0
    %v119 = vsel %vm96, %v93, 0
    %v122 = vsel %vm96, %v94, 0
    %v125 = vsel %vm96, %v95, 0
    %127 = vmatprep.subr.bf16.mxu0 0
    %128 = vmatpush1.bf16.xpose.msra.mxu0 %v104
    %129 = vmatprep.subr.bf16.mxu0 0
    %130 = vmatpush1.bf16.xpose.msra.mxu0 %v107
    %131 = vmatprep.subr.bf16.mxu0 0
    %132 = vmatpush1.bf16.xpose.msra.mxu0 %v110
    %133 = vmatprep.subr.bf16.mxu0 0
    %134 = vmatpush1.bf16.xpose.msra.mxu0 %v113
    %135 = vmatprep.subr.bf16.mxu0 0
    %136 = vmatpush1.bf16.xpose.msra.mxu0 %v116
    %137 = vmatprep.subr.bf16.mxu0 0
    %138 = vmatpush1.bf16.xpose.msra.mxu0 %v119
    %139 = vmatprep.subr.bf16.mxu0 0
    %140 = vmatpush1.bf16.xpose.msra.mxu0 %v122
    %141 = vmatprep.subr.bf16.mxu0 0
    %142 = vmatpush1.bf16.xpose.msra.mxu0 %v125
    %143 = vmatprep.subr.bf16.mxu0 0
    %144 = vmatpush1.bf16.xpose.msra.mxu0 0
    %145 = vmatprep.subr.bf16.mxu0 0
    %146 = vmatpush1.bf16.xpose.msra.mxu0 0
    %147 = vmatprep.subr.bf16.mxu0 0
    %148 = vmatpush1.bf16.xpose.msra.mxu0 0
    %149 = vmatprep.subr.bf16.mxu0 0
    %150 = vmatpush1.bf16.xpose.msra.mxu0 0
    %151 = vmatprep.subr.bf16.mxu0 0
    %152 = vmatpush1.bf16.xpose.msra.mxu0 0
    %153 = vmatprep.subr.bf16.mxu0 0
    %154 = vmatpush1.bf16.xpose.msra.mxu0 0
    %155 = vmatprep.subr.bf16.mxu0 0
    %156 = vmatpush1.bf16.xpose.msra.mxu0 0
    %157 = vmatprep.subr.bf16.mxu0 0
    %158 = vmatpush1.bf16.xpose.msra.mxu0 0
    %159 = vmatprep.mubr.bf16.mxu0 0
    %160 = vmatmul.mubr.bf16.gmra.mrb[0].mxu0 %v98
    %v161 = vpop.f32.mrb[0].mxu0
    %v162 = vadd.f32 0.0, %v161
    %v163 = vpop.f32.mrb[0].mxu0
    %v164 = vpop.f32.mrb[0].mxu0
    %v165 = vadd.f32 0.0, %v164
    %v166 = vpop.f32.mrb[0].mxu0
    %167 = vmatprep.mubr.bf16.mxu0 0
    %168 = vmatmul.mubr.bf16.gmra.mrb[0].mxu0 %v101
    %v169 = vpop.f32.mrb[0].mxu0
    %v170 = vadd.f32 0.0, %v169
    %v171 = vpop.f32.mrb[0].mxu0
    %v172 = vpop.f32.mrb[0].mxu0
    %v173 = vadd.f32 0.0, %v172
    %v174 = vpop.f32.mrb[0].mxu0
    %175 = vdwg.mxu0
    %v176 = vsub.f32 %v162, 2.0
    %v177 = vsub.f32 %v165, 2.0
    %v178 = vsub.f32 %v170, 2.0
    %v179 = vsub.f32 %v173, 2.0
    %v180 = vmul.f32 %v176, 1.442695
    %v181 = vpow.pop %v180
    %v182 = vmul.f32 %v177, 1.442695
    %v183 = vpow.pop %v182
    %v184 = vmul.f32 %v178, 1.442695
    %v185 = vpow.pop %v184
    %v186 = vmul.f32 %v179, 1.442695
    %v187 = vpow.pop %v186
    %v188 = vld [vmem:[%s2] sm:$0xff]
    %v189 = vld [vmem:[%s2 + $0x8] sm:$0xff]
    %v190 = vld [vmem:[%s2 + $0x10] sm:$0xff]
    %v191 = vld [vmem:[%s2 + $0x18] sm:$0xff]
    %193 = vset.pattern.permute.xlu0 0
    %194 = vperm.xlu0 %193, %v188
    %v195 = vpop.permute.xlu0 %194
    %198 = vset.pattern.permute.xlu0 0
    %199 = vperm.xlu0 %198, %v189
    %v200 = vpop.permute.xlu0 %199
    %203 = vset.pattern.permute.xlu0 0
    %204 = vperm.xlu0 %203, %v190
    %v205 = vpop.permute.xlu0 %204
    %208 = vset.pattern.permute.xlu0 0
    %209 = vperm.xlu0 %208, %v191
    %v210 = vpop.permute.xlu0 %209
    %v212 = vmul.f32 %v181, %v195
    %v213 = vmul.f32 %v183, %v200
    %v214 = vmul.f32 %v185, %v205
    %v215 = vmul.f32 %v187, %v210
    %v216 = vld [vmem:[%s3] sm:$0x1]
    %v218 = vlaneseq
    %v219 = vshrl.u32 %v218, 7
    %v220 = vsub.s32 0, %v219
    %v221 = vrot.slane %v216, %v220
    %v223 = vmul.f32 %v212, %v221
    %v224 = vmul.f32 %v213, %v221
    %v225 = vmul.f32 %v214, %v221
    %v226 = vmul.f32 %v215, %v221
    %227 = vadd.xlane.f32.xlu0 %v223
    %v228 = vpop.xlane.xlu0 %227
    %229 = vadd.xlane.f32.xlu0 %v224
    %v230 = vpop.xlane.xlu0 %229
    %231 = vadd.xlane.f32.xlu0 %v225
    %v232 = vpop.xlane.xlu0 %231
    %233 = vadd.xlane.f32.xlu0 %v226
    %v234 = vpop.xlane.xlu0 %233
    %vm235 = vcmask 7168
    %236 = vst.msk [vmem:[%s4] sm:$0xff] %vm235, %v228
    %237 = vst.msk [vmem:[%s4 + $0x8] sm:$0xff] %vm235, %v230
    %238 = vst.msk [vmem:[%s4 + $0x10] sm:$0xff] %vm235, %v232
    %239 = vst.msk [vmem:[%s4 + $0x18] sm:$0xff] %vm235, %v234
    %v240 = vadd.f32 %v223, %v224
    %v241 = vadd.f32 %v240, %v225
    %v242 = vadd.f32 %v241, %v226
    %v243 = vrot.slane %v242, 4
    %v244 = vadd.f32 %v242, %v243
    %v245 = vrot.slane %v244, 2
    %v246 = vadd.f32 %v244, %v245
    %v247 = vrot.slane %v246, 1
    %v248 = vadd.f32 %v246, %v247
    %249 = vst [vmem:[#allocation2] sm:$0x1] %v248
    // Predicated region
    $region18: #{tpu_custom_call.1} parent=1 // pred_check
      _
    $region19: #{tpu_custom_call.1} parent=1 // pred_check_branch
      %251 = sbr.rel (0) target = $region21
    $region20: #{tpu_custom_call.1} parent=1 // pred_region
      _
    $region21: #{tpu_custom_call.1} parent=1 // pred_fallthru
      _
    // Predicated region
    $region22: #{tpu_custom_call.1} parent=1 // pred_check
      _
    $region23: #{tpu_custom_call.1} parent=1 // pred_check_branch
      %253 = sbr.rel (0) target = $region25
    $region24: #{tpu_custom_call.1} parent=1 // pred_region
      %s255 = ssub.s32 16, 16
      %256 = vsyncadd [#allocation3], %s255
      %s258 = sshll.u32 [#allocation2], 4
      %s259 = int_to_ptr.vmem [resolvable:$true] %s258
      %261 = dma.vmem_to_hbm [thread:$0]  %s259, 16, %s5, [#allocation3]
    $region25: #{tpu_custom_call.1} parent=1 // pred_fallthru
      _
    // Predicated region
    $region26: #{tpu_custom_call.1} parent=1 // pred_check
      _
    $region27: #{tpu_custom_call.1} parent=1 // pred_check_branch
      %263 = sbr.rel (0) target = $region29
    $region28: #{tpu_custom_call.1} parent=1 // pred_region
      _
    $region29: #{tpu_custom_call.1} parent=1 // pred_fallthru
      _
    // Predicated region
    $region30: #{tpu_custom_call.1} parent=1 // pred_check
      _
    $region31: #{tpu_custom_call.1} parent=1 // pred_check_branch
      %265 = sbr.rel (0) target = $region33
    $region32: #{tpu_custom_call.1} parent=1 // pred_region
      %266 = dma.done [#allocation3], 16
    $region33: #{tpu_custom_call.1} parent=1 // pred_fallthru
      _
    %267 = vsyncpa [#allocation3], 1

</llo_original>
